<compile_context>
chip_gen: v6e
topology: v6e:2x2x1
jax: 0.10.0
libtpu: 0.0.40
codegen_flags: <defaults>
</compile_context>

<pallas_src>
import jax
import jax.numpy as jnp
from jax.experimental import pallas as pl
from jax.experimental.pallas import tpu as pltpu


def _round_up(x: int, m: int) -> int:
    return ((x + m - 1) // m) * m


def _sublane(dtype) -> int:
    # Native sublane tile height: f32 -> 8, bf16 -> 16, int8/fp8 -> 32.
    return 8 * (4 // jnp.dtype(dtype).itemsize)


def _choose_tile(dim: int, align: int, cap: int):
    """Pick (tile, padded_dim): tile is a multiple of `align`, <= cap, chosen to
    minimize padded_dim = round_up(dim, tile) (tie-break: larger tile)."""
    dim_aligned = _round_up(max(dim, 1), align)
    if dim_aligned <= cap:
        return dim_aligned, dim_aligned
    cap_aligned = (cap // align) * align
    best_tile, best_pad = align, _round_up(dim_aligned, align)
    for tile in range(cap_aligned, align - 1, -align):
        pad = _round_up(dim_aligned, tile)
        if pad < best_pad or (pad == best_pad and tile > best_tile):
            best_tile, best_pad = tile, pad
    return best_tile, best_pad


def _rhs_kernel_direct(x_ref, a_ref, b_ref, o_ref):
    """x @ A + b, accumulating directly into the resident f32 output block."""
    k = pl.program_id(2)

    @pl.when(k == 0)
    def _():
        o_ref[...] = jnp.zeros_like(o_ref)

    o_ref[...] += jnp.dot(x_ref[...], a_ref[...],
                          preferred_element_type=jnp.float32)

    @pl.when(k == pl.num_programs(2) - 1)
    def _():
        # Bias added exactly once, in the finalize branch.
        o_ref[...] += b_ref[...].astype(o_ref.dtype)


def _rhs_kernel_acc(x_ref, a_ref, b_ref, o_ref, acc_ref):
    """Same as above but with an f32 scratch accumulator for narrow outputs."""
    k = pl.program_id(2)

    @pl.when(k == 0)
    def _():
        acc_ref[...] = jnp.zeros_like(acc_ref)

    acc_ref[...] += jnp.dot(x_ref[...], a_ref[...],
                            preferred_element_type=jnp.float32)

    @pl.when(k == pl.num_programs(2) - 1)
    def _():
        o_ref[...] = (acc_ref[...] + b_ref[...].astype(jnp.float32)
                      ).astype(o_ref.dtype)


def _pallas_linear_rhs(xp, Ap, bp, *, tm, tn, tk, out_dtype):
    """Tiled Pallas evaluation of xp @ Ap + bp on pre-padded operands."""
    m_pad, k_pad = xp.shape
    _, n_pad = Ap.shape
    grid = (m_pad // tm, n_pad // tn, k_pad // tk)

    accumulate_in_out = jnp.dtype(out_dtype) == jnp.dtype(jnp.float32)
    kernel = _rhs_kernel_direct if accumulate_in_out else _rhs_kernel_acc
    scratch = [] if accumulate_in_out else [pltpu.VMEM((tm, tn), jnp.float32)]

    in_item = xp.dtype.itemsize
    out_item = jnp.dtype(out_dtype).itemsize
    # Double-buffered input tiles + output tile + bias (+ optional f32 scratch).
    footprint = (2 * (tm * tk + tk * tn) * in_item
                 + 2 * tm * tn * out_item
                 + 2 * tn * bp.dtype.itemsize
                 + (0 if accumulate_in_out else tm * tn * 4))
    # Explicit scoped-VMEM budget; clamped to 64 MiB so it is also legal on v7x.
    vmem_limit = int(min(64 << 20, max(32 << 20, footprint * 3 // 2)))

    cost = pl.CostEstimate(
        flops=2 * m_pad * n_pad * k_pad,
        transcendentals=0,
        bytes_accessed=(xp.size * in_item * (n_pad // tn)      # x streamed per j-tile
                        + Ap.size * in_item * (m_pad // tm)    # A streamed per i-tile
                        + bp.size * bp.dtype.itemsize
                        + m_pad * n_pad * out_item),
    )

    return pl.pallas_call(
        kernel,
        out_shape=jax.ShapeDtypeStruct((m_pad, n_pad), out_dtype),
        grid_spec=pltpu.PrefetchScalarGridSpec(
            num_scalar_prefetch=0,
            grid=grid,
            in_specs=[
                pl.BlockSpec((tm, tk), lambda i, j, k: (i, k)),   # x tile (ignores j)
                pl.BlockSpec((tk, tn), lambda i, j, k: (k, j)),   # A tile (ignores i)
                pl.BlockSpec((1, tn), lambda i, j, k: (0, j)),    # bias tile (ignores i, k)
            ],
            out_specs=pl.BlockSpec((tm, tn), lambda i, j, k: (i, j)),
            scratch_shapes=scratch,
        ),
        compiler_params=pltpu.CompilerParams(
            dimension_semantics=("parallel", "parallel", "arbitrary"),
            vmem_limit_bytes=vmem_limit,
        ),
        cost_estimate=cost,
    )(xp, Ap, bp)


class ODESystemPallas:
    """Pallas equivalent of neuromancer ODESystem with a linear ode_equations."""

    def __init__(self, insize, outsize, *, param_dtype=jnp.float32,
                 compute_dtype=None, tm_max=1024, tn_max=1024, tk_max=512,
                 key=None):
        self.in_features, self.out_features = insize, outsize
        self.compute_dtype = jnp.dtype(compute_dtype or param_dtype)
        self.tm_max = tm_max

        # Feature-axis tiles are fixed by (insize, outsize): lane axis multiples
        # of 128 chosen to minimize padding (no flat 512 cap).
        self.tk, self.k_pad = _choose_tile(insize, 128, tk_max)
        self.tn, self.n_pad = _choose_tile(outsize, 128, tn_max)

        # Deterministic parameter init (synthetic, no checkpoint load).
        if key is None:
            key = jax.random.PRNGKey(42)
        kA, kb = jax.random.split(key)
        scale = 1.0 / jnp.sqrt(jnp.float32(insize))
        self.A = (jax.random.normal(kA, (insize, outsize), jnp.float32)
                  * scale).astype(param_dtype)
        self.b = (jax.random.normal(kb, (1, outsize), jnp.float32) * 0.1
                  ).astype(jnp.float32)

        # Pre-pad / pre-cast parameters ONCE; only x is padded per call.
        A_c = self.A.astype(self.compute_dtype)
        if (self.k_pad, self.n_pad) != (insize, outsize):
            A_c = jnp.pad(A_c, ((0, self.k_pad - insize),
                                (0, self.n_pad - outsize)))
        self.Ap = A_c
        bp = self.b
        if self.n_pad != outsize:
            bp = jnp.pad(bp, ((0, 0), (0, self.n_pad - outsize)))
        self.bp = bp

    def ode_equations(self, x):
        batch, insize = x.shape
        assert insize == self.in_features
        out_dtype = x.dtype

        sub = _sublane(self.compute_dtype)
        tm, m_pad = _choose_tile(batch, sub, self.tm_max)

        xc = x.astype(self.compute_dtype)
        if (m_pad, self.k_pad) != (batch, insize):
            # Zero K-padding contributes nothing to x @ A.
            xc = jnp.pad(xc, ((0, m_pad - batch), (0, self.k_pad - insize)))

        out_p = _pallas_linear_rhs(xc, self.Ap, self.bp,
                                   tm=tm, tn=self.tn, tk=self.tk,
                                   out_dtype=out_dtype)

        if (m_pad, self.n_pad) != (batch, self.out_features):
            out_p = out_p[:batch, :self.out_features]
        return out_p

    def __call__(self, x):
        # forward() semantics of ODESystem: require a 2-D [batch, insize] input.
        assert len(x.shape) == 2
        return self.ode_equations(x)


if __name__ == "__main__":
    # Small shape consistent with the module; internally padded to one
    # (8, 128) tile so stores stay lane-dense.
    batch, insize, outsize = 8, 32, 32
    x = jax.random.normal(jax.random.PRNGKey(0), (batch, insize), jnp.float32)

    model = ODESystemPallas(insize, outsize)
    out = jax.block_until_ready(model(x))

    ref = jnp.dot(x, model.A, preferred_element_type=jnp.float32,
                  precision=jax.lax.Precision.HIGHEST) + model.b
    assert out.shape == (batch, outsize)
    assert jnp.allclose(out, ref, atol=1e-5, rtol=1e-5)

    # Multi-tile f32 check: outsize=768 now tiles with tn=768 (zero padded-N
    # work); exercises the (i, j, k) grid, K-axis accumulation directly into
    # the resident output block, and the bias-at-finalize epilogue.
    batch2, insize2, outsize2 = 1024, 1024, 768
    x2 = jax.random.normal(jax.random.PRNGKey(1), (batch2, insize2), jnp.float32)
    model2 = ODESystemPallas(insize2, outsize2)
    out2 = jax.block_until_ready(model2(x2))
    ref2 = jnp.dot(x2, model2.A, preferred_element_type=jnp.float32,
                   precision=jax.lax.Precision.HIGHEST) + model2.b
    assert out2.shape == (batch2, outsize2)
    assert jnp.allclose(out2, ref2, atol=2e-3, rtol=2e-3)

    # bf16 compute path (native MXU dtype on v5e/v6e/v7x), f32 accumulation and
    # f32 output; compared against the same-dtype XLA reference.
    model3 = ODESystemPallas(insize2, outsize2, compute_dtype=jnp.bfloat16)
    out3 = jax.block_until_ready(model3(x2))
    ref3 = jnp.dot(x2.astype(jnp.bfloat16), model3.A.astype(jnp.bfloat16),
                   preferred_element_type=jnp.float32) + model3.b
    assert out3.shape == (batch2, outsize2)
    assert out3.dtype == jnp.float32
    assert jnp.allclose(out3, ref3, atol=1e-2, rtol=1e-2)

    print("KERNEL_OK")
</pallas_src>

<mosaic_0001>
module attributes {stable_mosaic.version = 11 : i64} {
  func.func @_rhs_kernel_direct(%arg0: i32, %arg1: i32, %arg2: i32, %arg3: memref<8x128xf32, #tpu.memory_space<vmem>>, %arg4: memref<128x128xf32, #tpu.memory_space<vmem>>, %arg5: memref<1x128xf32, #tpu.memory_space<vmem>>, %arg6: memref<8x128xf32, #tpu.memory_space<vmem>>) attributes {dimension_semantics = [#tpu.dimension_semantics<parallel>, #tpu.dimension_semantics<parallel>, #tpu.dimension_semantics<arbitrary>], iteration_bounds = array<i64: 1, 1, 1>, scalar_prefetch = 0 : i64, scratch_operands = 0 : i64, tpu.core_type = #tpu.core_type<tc>, window_params = [{transform_indices = @transform_0, window_bounds = array<i64: 8, 128>}, {transform_indices = @transform_1, window_bounds = array<i64: 128, 128>}, {transform_indices = @transform_2, window_bounds = array<i64: 1, 128>}, {transform_indices = @transform_3, window_bounds = array<i64: 8, 128>}]} {
    %c0_i32 = arith.constant 0 : i32
    %0 = arith.cmpi eq, %arg2, %c0_i32 : i32
    %1 = arith.extui %0 : i1 to i32
    %c0_i32_0 = arith.constant 0 : i32
    %2 = arith.cmpi ne, %1, %c0_i32_0 : i32
    scf.if %2 {
      %cst_10 = arith.constant 0.000000e+00 : f32
      %12 = vector.broadcast %cst_10 : f32 to vector<8x128xf32>
      %c0_11 = arith.constant 0 : index
      %c0_12 = arith.constant 0 : index
      %13 = vector.load %arg6[%c0_11, %c0_12] : memref<8x128xf32, #tpu.memory_space<vmem>>, vector<8x128xf32>
      tpu.vector_store %arg6[%c0_11, %c0_12], %12 {strides = array<i32>} : memref<8x128xf32, #tpu.memory_space<vmem>>, vector<8x128xf32>,
    } else {
    }
    %c0 = arith.constant 0 : index
    %c0_1 = arith.constant 0 : index
    %3 = vector.load %arg6[%c0, %c0_1] : memref<8x128xf32, #tpu.memory_space<vmem>>, vector<8x128xf32>
    %c0_2 = arith.constant 0 : index
    %c0_3 = arith.constant 0 : index
    %4 = vector.load %arg3[%c0_2, %c0_3] : memref<8x128xf32, #tpu.memory_space<vmem>>, vector<8x128xf32>
    %c0_4 = arith.constant 0 : index
    %c0_5 = arith.constant 0 : index
    %5 = vector.load %arg4[%c0_4, %c0_5] : memref<128x128xf32, #tpu.memory_space<vmem>>, vector<128x128xf32>
    %cst = arith.constant dense<0.000000e+00> : vector<8x128xf32>
    %6 = tpu.matmul %4, %5, %cst {dimension_numbers = #tpu.dot_dimension_numbers<[1], [0], [0], [1], [0, 0, 1, 1], [], []>} : vector<8x128xf32>, vector<128x128xf32>, vector<8x128xf32> -> vector<8x128xf32>
    %7 = arith.addf %3, %6 : vector<8x128xf32>
    %c0_6 = arith.constant 0 : index
    %c0_7 = arith.constant 0 : index
    %8 = vector.load %arg6[%c0_6, %c0_7] : memref<8x128xf32, #tpu.memory_space<vmem>>, vector<8x128xf32>
    tpu.vector_store %arg6[%c0_6, %c0_7], %7 {strides = array<i32>} : memref<8x128xf32, #tpu.memory_space<vmem>>, vector<8x128xf32>,
    %c0_i32_8 = arith.constant 0 : i32
    %9 = arith.cmpi eq, %arg2, %c0_i32_8 : i32
    %10 = arith.extui %9 : i1 to i32
    %c0_i32_9 = arith.constant 0 : i32
    %11 = arith.cmpi ne, %10, %c0_i32_9 : i32
    scf.if %11 {
      %c0_10 = arith.constant 0 : index
      %c0_11 = arith.constant 0 : index
      %12 = vector.load %arg6[%c0_10, %c0_11] : memref<8x128xf32, #tpu.memory_space<vmem>>, vector<8x128xf32>
      %c0_12 = arith.constant 0 : index
      %c0_13 = arith.constant 0 : index
      %13 = vector.load %arg5[%c0_12, %c0_13] : memref<1x128xf32, #tpu.memory_space<vmem>>, vector<1x128xf32>
      %14 = vector.broadcast %13 : vector<1x128xf32> to vector<8x128xf32>
      %15 = arith.addf %12, %14 : vector<8x128xf32>
      %c0_14 = arith.constant 0 : index
      %c0_15 = arith.constant 0 : index
      %16 = vector.load %arg6[%c0_14, %c0_15] : memref<8x128xf32, #tpu.memory_space<vmem>>, vector<8x128xf32>
      tpu.vector_store %arg6[%c0_14, %c0_15], %15 {strides = array<i32>} : memref<8x128xf32, #tpu.memory_space<vmem>>, vector<8x128xf32>,
    } else {
    }
    return
  }
  func.func @transform_0(%arg0: i32, %arg1: i32, %arg2: i32) -> (i32, i32) {
    %c0_i32 = arith.constant 0 : i32
    return %arg0, %arg2 : i32, i32
  }
  func.func @transform_1(%arg0: i32, %arg1: i32, %arg2: i32) -> (i32, i32) {
    %c0_i32 = arith.constant 0 : i32
    return %arg2, %arg1 : i32, i32
  }
  func.func @transform_2(%arg0: i32, %arg1: i32, %arg2: i32) -> (i32, i32) {
    %c0_i32 = arith.constant 0 : i32
    %c0_i32_0 = arith.constant 0 : i32
    return %c0_i32, %arg1 : i32, i32
  }
  func.func @transform_3(%arg0: i32, %arg1: i32, %arg2: i32) -> (i32, i32) {
    %c0_i32 = arith.constant 0 : i32
    return %arg0, %arg1 : i32, i32
  }
}

</mosaic_0001>

<llo_original>
// kernel: tpu_custom_call.1
$region0: #{tpu_custom_call.1}
  #allocation0 [shape = 'u32[]', space=smem, size = 0x4, offset = 0x4, fixed_abs, tag = 'smem constant byte address 0x4 - core index']
  #allocation1 [shape = 'u32[144,128]{1,0:T(1,128)}', space=vmem, size = 0x12000, scoped, tag = 'internal scratch']
  %s0 = inlined_call_operand.hbm [shape: f32[8,128], index: 0, kind: input, shape index: {}]
  %s1 = inlined_call_operand.hbm [shape: f32[128,128], index: 1, kind: input, shape index: {}]
  %s2 = inlined_call_operand.vmem [shape: f32[1,128], index: 2, kind: input, shape index: {}]
  %s3 = inlined_call_operand.hbm [shape: f32[8,128], index: 3, kind: output, shape index: {}]
  %s4 = sld [smem:[#allocation0]]
  $region38: #{tpu_custom_call.1} parent=0
    _
  %s6 = ssub.s32 1, %s4
  %s7 = scalar_select 0, %s6, %s4
  $region1: #{tpu_custom_call.1} parent=0
    #allocation2 [shape = 'u8[4096]{0}', space=vmem, size = 0x1000, scoped, tag = 'input window, operand 0, single buffered']
    #allocation3 [shape = 's32[1]{0}', space=sflag, size = 0x4, scoped, tag = 'scoped memory for tpu_custom_call.1']
    #allocation4 [shape = 's32[1]{0}', space=sflag, size = 0x4, scoped, tag = 'scoped memory for tpu_custom_call.1']
    #allocation5 [shape = 'u8[65536]{0}', space=vmem, size = 0x10000, scoped, tag = 'input window, operand 1, single buffered']
    #allocation6 [shape = 's32[1]{0}', space=sflag, size = 0x4, scoped, tag = 'scoped memory for tpu_custom_call.1']
    #allocation7 [shape = 'u8[4096]{0}', space=vmem, size = 0x1000, scoped, tag = 'output window, operand 0, single buffered']
    %8 = vsyncpa [#allocation3], 0
    %9 = vsyncpa [#allocation6], 0
    %10 = vsyncpa [#allocation4], 0
    // Predicated region
    $region2: #{tpu_custom_call.1} parent=1 // pred_check
      _
    $region3: #{tpu_custom_call.1} parent=1 // pred_check_branch
      %12 = sbr.rel (0) target = $region5
    $region4: #{tpu_custom_call.1} parent=1 // pred_region
      %s14 = ssub.s32 128, 128
      %15 = vsyncadd [#allocation3], %s14
      %s17 = sshll.u32 [#allocation2], 4
      %s18 = int_to_ptr.vmem [resolvable:$true] %s17
      %20 = dma.hbm_to_vmem [thread:$0]  %s0, 128, %s18, [#allocation3]
    $region5: #{tpu_custom_call.1} parent=1 // pred_fallthru
      _
    // Predicated region
    $region6: #{tpu_custom_call.1} parent=1 // pred_check
      _
    $region7: #{tpu_custom_call.1} parent=1 // pred_check_branch
      %22 = sbr.rel (0) target = $region9
    $region8: #{tpu_custom_call.1} parent=1 // pred_region
      %s24 = ssub.s32 2048, 2048
      %25 = vsyncadd [#allocation6], %s24
      %s26 = sshll.u32 [#allocation5], 4
      %s27 = int_to_ptr.vmem [resolvable:$true] %s26
      %32 = dma.hbm_to_vmem [thread:$0]  %s1, 2048, %s27, [#allocation6], 128, 128, 8
    $region9: #{tpu_custom_call.1} parent=1 // pred_fallthru
      _
    // Predicated region
    $region10: #{tpu_custom_call.1} parent=1 // pred_check
      _
    $region11: #{tpu_custom_call.1} parent=1 // pred_check_branch
      %34 = sbr.rel (0) target = $region13
    $region12: #{tpu_custom_call.1} parent=1 // pred_region
      _
    $region13: #{tpu_custom_call.1} parent=1 // pred_fallthru
      _
    // Predicated region
    $region14: #{tpu_custom_call.1} parent=1 // pred_check
      _
    $region15: #{tpu_custom_call.1} parent=1 // pred_check_branch
      %36 = sbr.rel (0) target = $region17
    $region16: #{tpu_custom_call.1} parent=1 // pred_region
      %37 = dma.done [#allocation3], 128
    $region17: #{tpu_custom_call.1} parent=1 // pred_fallthru
      _
    // Predicated region
    $region18: #{tpu_custom_call.1} parent=1 // pred_check
      _
    $region19: #{tpu_custom_call.1} parent=1 // pred_check_branch
      %39 = sbr.rel (0) target = $region21
    $region20: #{tpu_custom_call.1} parent=1 // pred_region
      %40 = dma.done [#allocation6], 2048
    $region21: #{tpu_custom_call.1} parent=1 // pred_fallthru
      _
    %p41 = scmp.eq.s32.totalorder 0, 0
    // Predicated region
    $region22: #{tpu_custom_call.1} parent=1 // pred_check
      %p42 = pneg %p41
    $region23: #{tpu_custom_call.1} parent=1 // pred_check_branch
      %44 = sbr.rel (%p42) target = $region25
    $region24: #{tpu_custom_call.1} parent=1 // pred_region
      %45 = vst [vmem:[#allocation7] sm:$0xff] 0.0
    $region25: #{tpu_custom_call.1} parent=1 // pred_fallthru
      _
    %v46 = vld [vmem:[#allocation7] sm:$0xff]
    %v47 = vld [vmem:[#allocation2] sm:$0xff]
    %v48 = vld [vmem:[#allocation5] sm:$0xff]
    %v49 = vld [vmem:[#allocation5 + $0x8] sm:$0xff]
    %v50 = vld [vmem:[#allocation5 + $0x10] sm:$0xff]
    %v51 = vld [vmem:[#allocation5 + $0x18] sm:$0xff]
    %v52 = vld [vmem:[#allocation5 + $0x20] sm:$0xff]
    %v53 = vld [vmem:[#allocation5 + $0x28] sm:$0xff]
    %v54 = vld [vmem:[#allocation5 + $0x30] sm:$0xff]
    %v55 = vld [vmem:[#allocation5 + $0x38] sm:$0xff]
    %v56 = vld [vmem:[#allocation5 + $0x40] sm:$0xff]
    %v57 = vld [vmem:[#allocation5 + $0x48] sm:$0xff]
    %v58 = vld [vmem:[#allocation5 + $0x50] sm:$0xff]
    %v59 = vld [vmem:[#allocation5 + $0x58] sm:$0xff]
    %v60 = vld [vmem:[#allocation5 + $0x60] sm:$0xff]
    %v61 = vld [vmem:[#allocation5 + $0x68] sm:$0xff]
    %v62 = vld [vmem:[#allocation5 + $0x70] sm:$0xff]
    %v63 = vld [vmem:[#allocation5 + $0x78] sm:$0xff]
    %64 = vmatprep.subr.mxu0 0.0
    %65 = vmatpush1.msra.mxu0 %v63
    %66 = vmatprep.subr.mxu0 0.0
    %67 = vmatpush1.msra.mxu0 %v62
    %68 = vmatprep.subr.mxu0 0.0
    %69 = vmatpush1.msra.mxu0 %v61
    %70 = vmatprep.subr.mxu0 0.0
    %71 = vmatpush1.msra.mxu0 %v60
    %72 = vmatprep.subr.mxu0 0.0
    %73 = vmatpush1.msra.mxu0 %v59
    %74 = vmatprep.subr.mxu0 0.0
    %75 = vmatpush1.msra.mxu0 %v58
    %76 = vmatprep.subr.mxu0 0.0
    %77 = vmatpush1.msra.mxu0 %v57
    %78 = vmatprep.subr.mxu0 0.0
    %79 = vmatpush1.msra.mxu0 %v56
    %80 = vmatprep.subr.mxu0 0.0
    %81 = vmatpush1.msra.mxu0 %v55
    %82 = vmatprep.subr.mxu0 0.0
    %83 = vmatpush1.msra.mxu0 %v54
    %84 = vmatprep.subr.mxu0 0.0
    %85 = vmatpush1.msra.mxu0 %v53
    %86 = vmatprep.subr.mxu0 0.0
    %87 = vmatpush1.msra.mxu0 %v52
    %88 = vmatprep.subr.mxu0 0.0
    %89 = vmatpush1.msra.mxu0 %v51
    %90 = vmatprep.subr.mxu0 0.0
    %91 = vmatpush1.msra.mxu0 %v50
    %92 = vmatprep.subr.mxu0 0.0
    %93 = vmatpush1.msra.mxu0 %v49
    %94 = vmatprep.subr.mxu0 0.0
    %95 = vmatpush1.msra.mxu0 %v48
    %96 = vmatprep.subr.mxu0 0.0
    %97 = vmatpush2.msra.mxu0 0.0
    %98 = vmatprep.subr.mxu0 0.0
    %99 = vmatpush2.msra.mxu0 0.0
    %100 = vmatprep.subr.mxu0 0.0
    %101 = vmatpush2.msra.mxu0 0.0
    %102 = vmatprep.subr.mxu0 0.0
    %103 = vmatpush2.msra.mxu0 0.0
    %104 = vmatprep.subr.mxu0 0.0
    %105 = vmatpush2.msra.mxu0 0.0
    %106 = vmatprep.subr.mxu0 0.0
    %107 = vmatpush2.msra.mxu0 0.0
    %108 = vmatprep.subr.mxu0 0.0
    %109 = vmatpush2.msra.mxu0 0.0
    %110 = vmatprep.subr.mxu0 0.0
    %111 = vmatpush2.msra.mxu0 0.0
    %112 = vmatprep.subr.mxu0 0.0
    %113 = vmatpush2.msra.mxu0 0.0
    %114 = vmatprep.subr.mxu0 0.0
    %115 = vmatpush2.msra.mxu0 0.0
    %116 = vmatprep.subr.mxu0 0.0
    %117 = vmatpush2.msra.mxu0 0.0
    %118 = vmatprep.subr.mxu0 0.0
    %119 = vmatpush2.msra.mxu0 0.0
    %120 = vmatprep.subr.mxu0 0.0
    %121 = vmatpush2.msra.mxu0 0.0
    %122 = vmatprep.subr.mxu0 0.0
    %123 = vmatpush2.msra.mxu0 0.0
    %124 = vmatprep.subr.mxu0 0.0
    %125 = vmatpush2.msra.mxu0 0.0
    %126 = vmatprep.subr.mxu0 0.0
    %127 = vmatpush2.msra.mxu0 0.0
    %128 = vmatprep.mubr.f32.mxu0 0.0
    %129 = vmatmul.mubr.f32.gmra.mxu0 %v47
    %v130 = vpop.f32.mrf.mxu0
    %v131 = vadd.f32 0.0, %v130
    %v132 = vpop.f32.mrf.mxu0
    %133 = vdwg.mxu0
    %v134 = vadd.f32 %v46, %v131
    %135 = vst [vmem:[#allocation7] sm:$0xff] %v134
    // Predicated region
    $region26: #{tpu_custom_call.1} parent=1 // pred_check
      %p136 = pneg %p41
    $region27: #{tpu_custom_call.1} parent=1 // pred_check_branch
      %138 = sbr.rel (%p136) target = $region29
    $region28: #{tpu_custom_call.1} parent=1 // pred_region
      %v139 = vld [vmem:[#allocation7] sm:$0xff]
      %v140 = vld [vmem:[%s2] sm:$0x1]
      %v142 = vlaneseq
      %v143 = vshrl.u32 %v142, 7
      %v144 = vsub.s32 0, %v143
      %v145 = vrot.slane %v140, %v144
      %v147 = vadd.f32 %v139, %v145
      %148 = vst [vmem:[#allocation7] sm:$0xff] %v147
    $region29: #{tpu_custom_call.1} parent=1 // pred_fallthru
      _
    // Predicated region
    $region30: #{tpu_custom_call.1} parent=1 // pred_check
      _
    $region31: #{tpu_custom_call.1} parent=1 // pred_check_branch
      %150 = sbr.rel (0) target = $region33
    $region32: #{tpu_custom_call.1} parent=1 // pred_region
      %s152 = ssub.s32 128, 128
      %153 = vsyncadd [#allocation4], %s152
      %s155 = sshll.u32 [#allocation7], 4
      %s156 = int_to_ptr.vmem [resolvable:$true] %s155
      %158 = dma.vmem_to_hbm [thread:$0]  %s156, 128, %s3, [#allocation4]
    $region33: #{tpu_custom_call.1} parent=1 // pred_fallthru
      _
    // Predicated region
    $region34: #{tpu_custom_call.1} parent=1 // pred_check
      _
    $region35: #{tpu_custom_call.1} parent=1 // pred_check_branch
      %160 = sbr.rel (0) target = $region37
    $region36: #{tpu_custom_call.1} parent=1 // pred_region
      %161 = dma.done [#allocation4], 128
    $region37: #{tpu_custom_call.1} parent=1 // pred_fallthru
      _
    %162 = vsyncpa [#allocation3], 1
    %163 = vsyncpa [#allocation6], 1
    %164 = vsyncpa [#allocation4], 1

</llo_original>
